<compile_context>
chip_gen: v5e
topology: v5e:2x2
jax: 0.10.0
libtpu: 0.0.40
codegen_flags: <defaults>
</compile_context>

<pallas_src>
import functools

import jax
import jax.numpy as jnp
from jax.experimental import pallas as pl
from jax.experimental.pallas import tpu as pltpu

_LANE = 128          # lane width of a vreg (last dim)
_BATCH_TILE = 512    # batch tile once batch grows (multiple of 8 sublanes)


def _round_up(n: int, m: int) -> int:
    return ((n + m - 1) // m) * m


def _fused_mlp_kernel(*refs, num_hidden: int):
    """Fused MLP forward.

    refs = (x_ref,
            w0_ref, b0_ref, ..., w_{H-1}_ref, b_{H-1}_ref,   # hidden layers
            w_out_row_ref, b_out_ref,                        # output layer
            o_ref)

    Intermediate activations are plain traced values (vregs / VMEM spill);
    only the final (tile, 1) value is stored.
    """
    x_ref = refs[0]
    o_ref = refs[-1]
    wb = refs[1:-1]

    h = x_ref[...].astype(jnp.float32)
    for i in range(num_hidden):
        w = wb[2 * i][...]                 # (in, out_pad)
        b = wb[2 * i + 1][...]             # (1, out_pad) -> broadcasts
        h = jnp.maximum(
            jnp.dot(h, w, preferred_element_type=jnp.float32) + b, 0.0)

    # Output layer as VPU mul + lane reduction (skips padded W_last matmul).
    w_row = wb[2 * num_hidden][...]        # (1, hidden_pad), zeros in padding
    b_out = wb[2 * num_hidden + 1][...]    # (1, 1)
    val = jnp.sum(h * w_row, axis=-1, keepdims=True) + b_out
    o_ref[...] = val.astype(o_ref.dtype)


def init_state_value_agent_params(key, in_d, h_shape):
    """Deterministic init mirroring nn.Linear's default
    U(-1/sqrt(fan_in), 1/sqrt(fan_in)). Weights stored as (in, out)."""
    params = []
    current_in = in_d
    dims = list(h_shape) + [1]             # hidden layers + final (->1) layer
    for h in dims:
        key, kw, kb = jax.random.split(key, 3)
        bound = 1.0 / jnp.sqrt(jnp.asarray(current_in, jnp.float32))
        w = jax.random.uniform(kw, (current_in, h), jnp.float32,
                               minval=-bound, maxval=bound)
        b = jax.random.uniform(kb, (h,), jnp.float32,
                               minval=-bound, maxval=bound)
        params.append((w, b))
        current_in = h
    return params


def prepare_state_value_agent_params(params):
    """One-time, kernel-ready parameter layout.

    Hidden layers: W (in, out_pad), b (1, out_pad) with zero padding (lane dim
    multiple of 128).  Layer 0 keeps its true input width so x needs no pad.
    Output layer: (1, hidden_pad) row vector + (1, 1) bias scalar for the
    in-kernel lane reduction.
    """
    hidden = params[:-1]
    w_last, b_last = params[-1]

    prepped_hidden = []
    for idx, (w, b) in enumerate(hidden):
        in_f, out_f = w.shape
        in_p = in_f if idx == 0 else _round_up(in_f, _LANE)
        out_p = _round_up(out_f, _LANE)
        w_p = jnp.zeros((in_p, out_p), jnp.float32).at[:in_f, :out_f].set(w)
        b_p = jnp.zeros((1, out_p), jnp.float32).at[0, :out_f].set(b)
        prepped_hidden.append((w_p, b_p))

    h_last = w_last.shape[0]
    h_last_p = _round_up(h_last, _LANE)
    w_row = jnp.zeros((1, h_last_p), jnp.float32).at[0, :h_last].set(
        w_last[:, 0])
    b_out = jnp.reshape(b_last.astype(jnp.float32), (1, 1))
    return prepped_hidden, (w_row, b_out)


def state_value_agent_forward(prepped_params, x):
    """Forward pass: ReLU(Linear) for every hidden layer, then Linear(->1).

    x is (batch, in_d) and is passed to the kernel unpadded; the result is
    exactly (batch, 1) — no wrapper-side pad/slice ops."""
    hidden_params, (w_row, b_out) = prepped_params
    batch, in_d = x.shape
    num_hidden = len(hidden_params)

    # One full-extent tile for small batches; 512-row tiles (parallel across
    # TensorCores) once batch scales.
    tile_b = batch if batch <= _BATCH_TILE else _BATCH_TILE
    grid = (pl.cdiv(batch, tile_b),)

    operands = [x]
    in_specs = [pl.BlockSpec((tile_b, in_d), lambda i: (i, 0))]
    for w, b in hidden_params:
        operands += [w, b]
        in_specs += [pl.BlockSpec(w.shape, lambda i: (0, 0)),
                     pl.BlockSpec(b.shape, lambda i: (0, 0))]
    operands += [w_row, b_out]
    in_specs += [pl.BlockSpec(w_row.shape, lambda i: (0, 0)),
                 pl.BlockSpec(b_out.shape, lambda i: (0, 0))]
    out_spec = pl.BlockSpec((tile_b, 1), lambda i: (i, 0))

    # Advisory cost hint so XLA can overlap neighboring work with the kernel.
    flops = 0
    for w, _ in hidden_params:
        flops += 2 * batch * w.shape[0] * w.shape[1]
    flops += 2 * batch * w_row.shape[1]
    bytes_accessed = (sum(int(a.size) * a.dtype.itemsize for a in operands)
                      + batch * 4)
    cost = pl.CostEstimate(flops=flops, transcendentals=0,
                           bytes_accessed=bytes_accessed)

    kernel = functools.partial(_fused_mlp_kernel, num_hidden=num_hidden)
    return pl.pallas_call(
        kernel,
        out_shape=jax.ShapeDtypeStruct((batch, 1), jnp.float32),
        grid=grid,
        in_specs=in_specs,
        out_specs=out_spec,
        compiler_params=pltpu.CompilerParams(
            dimension_semantics=("parallel",)),
        cost_estimate=cost,
    )(*operands)


if __name__ == "__main__":
    # Small shapes consistent with the module: batch=2, in_d=16, hidden=[32, 32].
    batch = 2
    in_d = 16
    h_shape = [32, 32]

    key = jax.random.PRNGKey(0)
    key, kx = jax.random.split(key)

    x = jax.random.normal(kx, (batch, in_d), dtype=jnp.float32)
    params = init_state_value_agent_params(key, in_d, h_shape)
    prepped = prepare_state_value_agent_params(params)

    out = state_value_agent_forward(prepped, x)
    out = jax.block_until_ready(out)

    assert out.shape == (batch, 1), f"unexpected output shape {out.shape}"
    assert out.dtype == jnp.float32

    # Cross-check against a pure-JAX reference of the same math (unpadded).
    ref = x
    for (w, b) in params[:-1]:
        ref = jnp.maximum(ref @ w + b, 0.0)
    ref = ref @ params[-1][0] + params[-1][1]
    assert jnp.allclose(out, ref, atol=1e-5, rtol=1e-5), (out, ref)

    print("KERNEL_OK")
</pallas_src>

<mosaic_0001>
module attributes {stable_mosaic.version = 11 : i64} {
  func.func @_fused_mlp_kernel(%arg0: i32, %arg1: memref<2x16xf32, #tpu.memory_space<vmem>>, %arg2: memref<16x128xf32, #tpu.memory_space<vmem>>, %arg3: memref<1x128xf32, #tpu.memory_space<vmem>>, %arg4: memref<128x128xf32, #tpu.memory_space<vmem>>, %arg5: memref<1x128xf32, #tpu.memory_space<vmem>>, %arg6: memref<1x128xf32, #tpu.memory_space<vmem>>, %arg7: memref<1x1xf32, #tpu.memory_space<vmem>>, %arg8: memref<2x1xf32, #tpu.memory_space<vmem>>) attributes {dimension_semantics = [#tpu.dimension_semantics<parallel>], iteration_bounds = array<i64: 1>, scalar_prefetch = 0 : i64, scratch_operands = 0 : i64, tpu.core_type = #tpu.core_type<tc>, window_params = [{transform_indices = @transform_0, window_bounds = array<i64: 2, 16>}, {pipeline_mode = #tpu.pipeline_mode<synchronous>, transform_indices = @transform_1, window_bounds = array<i64: 16, 128>}, {pipeline_mode = #tpu.pipeline_mode<synchronous>, transform_indices = @transform_2, window_bounds = array<i64: 1, 128>}, {pipeline_mode = #tpu.pipeline_mode<synchronous>, transform_indices = @transform_3, window_bounds = array<i64: 128, 128>}, {pipeline_mode = #tpu.pipeline_mode<synchronous>, transform_indices = @transform_4, window_bounds = array<i64: 1, 128>}, {pipeline_mode = #tpu.pipeline_mode<synchronous>, transform_indices = @transform_5, window_bounds = array<i64: 1, 128>}, {pipeline_mode = #tpu.pipeline_mode<synchronous>, transform_indices = @transform_6, window_bounds = array<i64: 1, 1>}, {transform_indices = @transform_7, window_bounds = array<i64: 2, 1>}]} {
    %c0 = arith.constant 0 : index
    %c0_0 = arith.constant 0 : index
    %0 = vector.load %arg1[%c0, %c0_0] : memref<2x16xf32, #tpu.memory_space<vmem>>, vector<2x16xf32>
    %c0_1 = arith.constant 0 : index
    %c0_2 = arith.constant 0 : index
    %1 = vector.load %arg2[%c0_1, %c0_2] : memref<16x128xf32, #tpu.memory_space<vmem>>, vector<16x128xf32>
    %c0_3 = arith.constant 0 : index
    %c0_4 = arith.constant 0 : index
    %2 = vector.load %arg3[%c0_3, %c0_4] : memref<1x128xf32, #tpu.memory_space<vmem>>, vector<1x128xf32>
    %cst = arith.constant dense<0.000000e+00> : vector<2x128xf32>
    %3 = tpu.matmul %0, %1, %cst {dimension_numbers = #tpu.dot_dimension_numbers<[1], [0], [0], [1], [0, 0, 1, 1], [], []>} : vector<2x16xf32>, vector<16x128xf32>, vector<2x128xf32> -> vector<2x128xf32>
    %4 = vector.broadcast %2 : vector<1x128xf32> to vector<2x128xf32>
    %5 = arith.addf %3, %4 : vector<2x128xf32>
    %cst_5 = arith.constant 0.000000e+00 : f32
    %6 = vector.broadcast %cst_5 : f32 to vector<2x128xf32>
    %7 = arith.maximumf %5, %6 : vector<2x128xf32>
    %c0_6 = arith.constant 0 : index
    %c0_7 = arith.constant 0 : index
    %8 = vector.load %arg4[%c0_6, %c0_7] : memref<128x128xf32, #tpu.memory_space<vmem>>, vector<128x128xf32>
    %c0_8 = arith.constant 0 : index
    %c0_9 = arith.constant 0 : index
    %9 = vector.load %arg5[%c0_8, %c0_9] : memref<1x128xf32, #tpu.memory_space<vmem>>, vector<1x128xf32>
    %cst_10 = arith.constant dense<0.000000e+00> : vector<2x128xf32>
    %10 = tpu.matmul %7, %8, %cst_10 {dimension_numbers = #tpu.dot_dimension_numbers<[1], [0], [0], [1], [0, 0, 1, 1], [], []>} : vector<2x128xf32>, vector<128x128xf32>, vector<2x128xf32> -> vector<2x128xf32>
    %11 = vector.broadcast %9 : vector<1x128xf32> to vector<2x128xf32>
    %12 = arith.addf %10, %11 : vector<2x128xf32>
    %cst_11 = arith.constant 0.000000e+00 : f32
    %13 = vector.broadcast %cst_11 : f32 to vector<2x128xf32>
    %14 = arith.maximumf %12, %13 : vector<2x128xf32>
    %c0_12 = arith.constant 0 : index
    %c0_13 = arith.constant 0 : index
    %15 = vector.load %arg6[%c0_12, %c0_13] : memref<1x128xf32, #tpu.memory_space<vmem>>, vector<1x128xf32>
    %c0_14 = arith.constant 0 : index
    %c0_15 = arith.constant 0 : index
    %16 = vector.load %arg7[%c0_14, %c0_15] : memref<1x1xf32, #tpu.memory_space<vmem>>, vector<1x1xf32>
    %17 = vector.broadcast %15 : vector<1x128xf32> to vector<2x128xf32>
    %18 = arith.mulf %14, %17 : vector<2x128xf32>
    %cst_16 = arith.constant dense<0.000000e+00> : vector<2xf32>
    %19 = vector.multi_reduction <add>, %18, %cst_16 [1] : vector<2x128xf32> to vector<2xf32>
    %20 = vector.shape_cast %19 : vector<2xf32> to vector<2x1xf32>
    %21 = vector.broadcast %16 : vector<1x1xf32> to vector<2x1xf32>
    %22 = arith.addf %20, %21 : vector<2x1xf32>
    %c0_17 = arith.constant 0 : index
    %c0_18 = arith.constant 0 : index
    %23 = vector.load %arg8[%c0_17, %c0_18] : memref<2x1xf32, #tpu.memory_space<vmem>>, vector<2x1xf32>
    tpu.vector_store %arg8[%c0_17, %c0_18], %22 {strides = array<i32>} : memref<2x1xf32, #tpu.memory_space<vmem>>, vector<2x1xf32>,
    return
  }
  func.func @transform_0(%arg0: i32) -> (i32, i32) {
    %c0_i32 = arith.constant 0 : i32
    %c0_i32_0 = arith.constant 0 : i32
    return %arg0, %c0_i32 : i32, i32
  }
  func.func @transform_1(%arg0: i32) -> (i32, i32) {
    %c0_i32 = arith.constant 0 : i32
    %c0_i32_0 = arith.constant 0 : i32
    %c0_i32_1 = arith.constant 0 : i32
    return %c0_i32, %c0_i32_0 : i32, i32
  }
  func.func @transform_2(%arg0: i32) -> (i32, i32) {
    %c0_i32 = arith.constant 0 : i32
    %c0_i32_0 = arith.constant 0 : i32
    %c0_i32_1 = arith.constant 0 : i32
    return %c0_i32, %c0_i32_0 : i32, i32
  }
  func.func @transform_3(%arg0: i32) -> (i32, i32) {
    %c0_i32 = arith.constant 0 : i32
    %c0_i32_0 = arith.constant 0 : i32
    %c0_i32_1 = arith.constant 0 : i32
    return %c0_i32, %c0_i32_0 : i32, i32
  }
  func.func @transform_4(%arg0: i32) -> (i32, i32) {
    %c0_i32 = arith.constant 0 : i32
    %c0_i32_0 = arith.constant 0 : i32
    %c0_i32_1 = arith.constant 0 : i32
    return %c0_i32, %c0_i32_0 : i32, i32
  }
  func.func @transform_5(%arg0: i32) -> (i32, i32) {
    %c0_i32 = arith.constant 0 : i32
    %c0_i32_0 = arith.constant 0 : i32
    %c0_i32_1 = arith.constant 0 : i32
    return %c0_i32, %c0_i32_0 : i32, i32
  }
  func.func @transform_6(%arg0: i32) -> (i32, i32) {
    %c0_i32 = arith.constant 0 : i32
    %c0_i32_0 = arith.constant 0 : i32
    %c0_i32_1 = arith.constant 0 : i32
    return %c0_i32, %c0_i32_0 : i32, i32
  }
  func.func @transform_7(%arg0: i32) -> (i32, i32) {
    %c0_i32 = arith.constant 0 : i32
    %c0_i32_0 = arith.constant 0 : i32
    return %arg0, %c0_i32 : i32, i32
  }
}

</mosaic_0001>

<llo_original>
// kernel: tpu_custom_call.1
$region0: #{tpu_custom_call.1}
  #allocation0 [shape = 'u32[]', space=smem, size = 0x4, offset = 0x4, fixed_abs, tag = 'smem constant byte address 0x4 - core index']
  #allocation1 [shape = 'u32[72,128]{1,0:T(1,128)}', space=vmem, size = 0x9000, scoped, tag = 'internal scratch']
  #allocation2 [shape = 'f32[1,1]{1,0:T(1,128)S(1)}', space=vmem, size = 0x200, scoped, tag = 'scoped memory for tpu_custom_call.1']
  %s0 = inlined_call_operand.vmem [shape: f32[2,16], index: 0, kind: input, shape index: {}]
  %s1 = inlined_call_operand.hbm [shape: f32[16,128], index: 1, kind: input, shape index: {}]
  %s2 = inlined_call_operand.vmem [shape: f32[1,128], index: 2, kind: input, shape index: {}]
  %s3 = inlined_call_operand.hbm [shape: f32[128,128], index: 3, kind: input, shape index: {}]
  %s4 = inlined_call_operand.vmem [shape: f32[1,128], index: 4, kind: input, shape index: {}]
  %s5 = inlined_call_operand.vmem [shape: f32[1,128], index: 5, kind: input, shape index: {}]
  %s6 = inlined_call_operand.<no memory space> [shape: f32[1,1], index: 6, kind: input, shape index: {}]
  %s7 = inlined_call_operand.vmem [shape: f32[2,1], index: 7, kind: output, shape index: {}]
  %s8 = sld [smem:[#allocation0]]
  $region46: #{tpu_custom_call.1} parent=0
    _
  %s10 = ssub.s32 1, %s8
  %s11 = scalar_select 0, %s10, %s8
  %v12 = vstv %s6
  %13 = vst [vmem:[#allocation2] sm:$0x1] %v12
  $region1: #{tpu_custom_call.1} parent=0
    #allocation3 [shape = 'u8[8192]{0}', space=vmem, size = 0x2000, scoped, tag = 'input window, operand 1, single buffered']
    #allocation4 [shape = 's32[1]{0}', space=sflag, size = 0x4, scoped, tag = 'scoped memory for tpu_custom_call.1']
    #allocation5 [shape = 'u8[65536]{0}', space=vmem, size = 0x10000, scoped, tag = 'input window, operand 3, single buffered']
    #allocation6 [shape = 's32[1]{0}', space=sflag, size = 0x4, scoped, tag = 'scoped memory for tpu_custom_call.1']
    %14 = vsyncpa [#allocation4], 0
    %15 = vsyncpa [#allocation6], 0
    // Predicated region
    $region2: #{tpu_custom_call.1} parent=1 // pred_check
      _
    $region3: #{tpu_custom_call.1} parent=1 // pred_check_branch
      %17 = sbr.rel (0) target = $region5
    $region4: #{tpu_custom_call.1} parent=1 // pred_region
      _
    $region5: #{tpu_custom_call.1} parent=1 // pred_fallthru
      _
    // Predicated region
    $region6: #{tpu_custom_call.1} parent=1 // pred_check
      _
    $region7: #{tpu_custom_call.1} parent=1 // pred_check_branch
      %19 = sbr.rel (0) target = $region9
    $region8: #{tpu_custom_call.1} parent=1 // pred_region
      %21 = vsyncadd [#allocation4], 0
      %s22 = sshll.u32 %s1, 4
      %s23 = int_to_ptr.hbm [resolvable:$true] %s22
      %s24 = sshll.u32 [#allocation3], 4
      %s25 = int_to_ptr.vmem [resolvable:$true] %s24
      %30 = dma.hbm_to_vmem [thread:$0]  %s23, 256, %s25, [#allocation4], 128, 128, 8
    $region9: #{tpu_custom_call.1} parent=1 // pred_fallthru
      _
    // Predicated region
    $region10: #{tpu_custom_call.1} parent=1 // pred_check
      _
    $region11: #{tpu_custom_call.1} parent=1 // pred_check_branch
      %32 = sbr.rel (0) target = $region13
    $region12: #{tpu_custom_call.1} parent=1 // pred_region
      _
    $region13: #{tpu_custom_call.1} parent=1 // pred_fallthru
      _
    // Predicated region
    $region14: #{tpu_custom_call.1} parent=1 // pred_check
      _
    $region15: #{tpu_custom_call.1} parent=1 // pred_check_branch
      %34 = sbr.rel (0) target = $region17
    $region16: #{tpu_custom_call.1} parent=1 // pred_region
      %36 = vsyncadd [#allocation6], 0
      %s37 = sshll.u32 %s3, 4
      %s38 = int_to_ptr.hbm [resolvable:$true] %s37
      %s39 = sshll.u32 [#allocation5], 4
      %s40 = int_to_ptr.vmem [resolvable:$true] %s39
      %45 = dma.hbm_to_vmem [thread:$0]  %s38, 2048, %s40, [#allocation6], 128, 128, 8
    $region17: #{tpu_custom_call.1} parent=1 // pred_fallthru
      _
    // Predicated region
    $region18: #{tpu_custom_call.1} parent=1 // pred_check
      _
    $region19: #{tpu_custom_call.1} parent=1 // pred_check_branch
      %47 = sbr.rel (0) target = $region21
    $region20: #{tpu_custom_call.1} parent=1 // pred_region
      _
    $region21: #{tpu_custom_call.1} parent=1 // pred_fallthru
      _
    // Predicated region
    $region22: #{tpu_custom_call.1} parent=1 // pred_check
      _
    $region23: #{tpu_custom_call.1} parent=1 // pred_check_branch
      %49 = sbr.rel (0) target = $region25
    $region24: #{tpu_custom_call.1} parent=1 // pred_region
      _
    $region25: #{tpu_custom_call.1} parent=1 // pred_fallthru
      _
    // Predicated region
    $region26: #{tpu_custom_call.1} parent=1 // pred_check
      _
    $region27: #{tpu_custom_call.1} parent=1 // pred_check_branch
      %51 = sbr.rel (0) target = $region29
    $region28: #{tpu_custom_call.1} parent=1 // pred_region
      _
    $region29: #{tpu_custom_call.1} parent=1 // pred_fallthru
      _
    // Predicated region
    $region30: #{tpu_custom_call.1} parent=1 // pred_check
      _
    $region31: #{tpu_custom_call.1} parent=1 // pred_check_branch
      %53 = sbr.rel (0) target = $region33
    $region32: #{tpu_custom_call.1} parent=1 // pred_region
      %55 = dma.done [#allocation4], 256
    $region33: #{tpu_custom_call.1} parent=1 // pred_fallthru
      _
    // Predicated region
    $region34: #{tpu_custom_call.1} parent=1 // pred_check
      _
    $region35: #{tpu_custom_call.1} parent=1 // pred_check_branch
      %57 = sbr.rel (0) target = $region37
    $region36: #{tpu_custom_call.1} parent=1 // pred_region
      %59 = dma.done [#allocation6], 2048
    $region37: #{tpu_custom_call.1} parent=1 // pred_fallthru
      _
    %v60 = vld [vmem:[%s0] sm:$0x3]
    %v61 = vld [vmem:[#allocation3] sm:$0xff]
    %v62 = vld [vmem:[#allocation3 + $0x8] sm:$0xff]
    %v63 = vld [vmem:[%s2] sm:$0x1]
    %v65 = vperm.slane %v63, 0
    %vm67 = vcmask 130048
    %v69 = vsel %vm67, %v60, 0
    %71 = vmatpush.msra.mxu0 0.0
    %72 = vmatpush.msra.mxu0 0.0
    %73 = vmatpush.msra.mxu0 0.0
    %74 = vmatpush.msra.mxu0 0.0
    %75 = vmatpush.msra.mxu0 0.0
    %76 = vmatpush.msra.mxu0 0.0
    %77 = vmatpush.msra.mxu0 0.0
    %78 = vmatpush.msra.mxu0 0.0
    %79 = vmatpush.msra.mxu0 0.0
    %80 = vmatpush.msra.mxu0 0.0
    %81 = vmatpush.msra.mxu0 0.0
    %82 = vmatpush.msra.mxu0 0.0
    %83 = vmatpush.msra.mxu0 0.0
    %84 = vmatpush.msra.mxu0 0.0
    %85 = vmatpush.msra.mxu0 %v62
    %86 = vmatpush.msra.mxu0 %v61
    %87 = vmatmul.f32.gmra.mxu0 %v69
    %v88 = vpop.f32.mrf.mxu0
    %v89 = vadd.f32 %v65, %v88
    %90 = vdwg.mxu0
    %v91 = vmax.f32 %v89, 0.0
    %v92 = vld [vmem:[#allocation5] sm:$0xff]
    %v93 = vld [vmem:[#allocation5 + $0x8] sm:$0xff]
    %v94 = vld [vmem:[#allocation5 + $0x10] sm:$0xff]
    %v95 = vld [vmem:[#allocation5 + $0x18] sm:$0xff]
    %v96 = vld [vmem:[#allocation5 + $0x20] sm:$0xff]
    %v97 = vld [vmem:[#allocation5 + $0x28] sm:$0xff]
    %v98 = vld [vmem:[#allocation5 + $0x30] sm:$0xff]
    %v99 = vld [vmem:[#allocation5 + $0x38] sm:$0xff]
    %v100 = vld [vmem:[#allocation5 + $0x40] sm:$0xff]
    %v101 = vld [vmem:[#allocation5 + $0x48] sm:$0xff]
    %v102 = vld [vmem:[#allocation5 + $0x50] sm:$0xff]
    %v103 = vld [vmem:[#allocation5 + $0x58] sm:$0xff]
    %v104 = vld [vmem:[#allocation5 + $0x60] sm:$0xff]
    %v105 = vld [vmem:[#allocation5 + $0x68] sm:$0xff]
    %v106 = vld [vmem:[#allocation5 + $0x70] sm:$0xff]
    %v107 = vld [vmem:[#allocation5 + $0x78] sm:$0xff]
    %v108 = vld [vmem:[%s4] sm:$0x1]
    %v110 = vperm.slane %v108, 0
    %112 = vmatpush.msra.mxu0 %v107
    %113 = vmatpush.msra.mxu0 %v106
    %114 = vmatpush.msra.mxu0 %v105
    %115 = vmatpush.msra.mxu0 %v104
    %116 = vmatpush.msra.mxu0 %v103
    %117 = vmatpush.msra.mxu0 %v102
    %118 = vmatpush.msra.mxu0 %v101
    %119 = vmatpush.msra.mxu0 %v100
    %120 = vmatpush.msra.mxu0 %v99
    %121 = vmatpush.msra.mxu0 %v98
    %122 = vmatpush.msra.mxu0 %v97
    %123 = vmatpush.msra.mxu0 %v96
    %124 = vmatpush.msra.mxu0 %v95
    %125 = vmatpush.msra.mxu0 %v94
    %126 = vmatpush.msra.mxu0 %v93
    %127 = vmatpush.msra.mxu0 %v92
    %128 = vmatmul.f32.gmra.mxu0 %v91
    %v129 = vpop.f32.mrf.mxu0
    %v130 = vadd.f32 %v110, %v129
    %131 = vdwg.mxu0
    %v132 = vmax.f32 %v130, 0.0
    %v133 = vld [vmem:[%s5] sm:$0x1]
    %v134 = vld [vmem:[#allocation2] sm:$0x1]
    %v136 = vperm.slane %v133, 0
    %v138 = vmul.f32 %v132, %v136
    %vm139 = vcmask 1041408
    %v140 = vsel %vm139, %v138, 0.0
    %141 = vadd.xlane.f32.xlu0 %v140
    %v142 = vpop.xlane.xlu0 %141
    %v144 = vperm.slane %v134, 0
    %v146 = vadd.f32 %v142, %v144
    %vm147 = vcmask 1024
    %148 = vst.msk [vmem:[%s7] sm:$0x3] %vm147, %v146
    // Predicated region
    $region38: #{tpu_custom_call.1} parent=1 // pred_check
      _
    $region39: #{tpu_custom_call.1} parent=1 // pred_check_branch
      %150 = sbr.rel (0) target = $region41
    $region40: #{tpu_custom_call.1} parent=1 // pred_region
      _
    $region41: #{tpu_custom_call.1} parent=1 // pred_fallthru
      _
    // Predicated region
    $region42: #{tpu_custom_call.1} parent=1 // pred_check
      _
    $region43: #{tpu_custom_call.1} parent=1 // pred_check_branch
      %152 = sbr.rel (0) target = $region45
    $region44: #{tpu_custom_call.1} parent=1 // pred_region
      _
    $region45: #{tpu_custom_call.1} parent=1 // pred_fallthru
      _
    %153 = vsyncpa [#allocation4], 1
    %154 = vsyncpa [#allocation6], 1

</llo_original>
